<compile_context>
chip_gen: v7x
topology: tpu7x:2x2x1
jax: 0.10.0
libtpu: 0.0.40
codegen_flags: <defaults>
</compile_context>

<pallas_src>
import numpy as np
import jax
import jax.numpy as jnp
from jax import lax
from jax.experimental import pallas as pl
from jax.experimental.pallas import tpu as pltpu


def _round_up(x, m):
    return ((x + m - 1) // m) * m


def _choose_tile(n, preferred=None):
    """Pick a row/col tile (multiple of 8, <= 512)."""
    n8 = _round_up(max(int(n), 1), 8)
    if preferred is not None:
        t = _round_up(max(8, min(int(preferred), 512)), 8)
        return min(t, n8)
    if n8 <= 128:
        return n8                       # single padded block for small N
    best_t, best_key = None, None
    for t in (256, 128):                # minimize padding, prefer larger tile
        key = (_round_up(n, t), -t)
        if best_key is None or key < best_key:
            best_key, best_t = key, t
    return best_t


def _make_hsic_pair_kernel(n, n_pad, tile, bf16_matmul):
    need_mask = n_pad != n

    def kernel(ii_ref, jj_ref, e1_ref, e2_ref, r1_ref, r2_ref,
               row1_ref, col1_ref, row2_ref, col2_ref, frob_ref):
        p = pl.program_id(0)
        i_blk = ii_ref[p]
        j_blk = jj_ref[p]
        row_start = pl.multiple_of(i_blk * tile, tile)
        col_start = pl.multiple_of(j_blk * tile, tile)

        # Masks shared by both kernel matrices (built once per grid step).
        pad_mask = None
        if need_mask:
            rid = row_start + lax.broadcasted_iota(jnp.int32, (tile, tile), 0)
            cid = col_start + lax.broadcasted_iota(jnp.int32, (tile, tile), 1)
            pad_mask = jnp.logical_and(rid < n, cid < n)
        diag_mask = None
        if bf16_matmul:
            li = lax.broadcasted_iota(jnp.int32, (tile, tile), 0)
            lj = lax.broadcasted_iota(jnp.int32, (tile, tile), 1)
            diag_mask = jnp.logical_and(li == lj, i_blk == j_blk)

        def rbf_tile(e_ref, r_ref):
            xr = e_ref[pl.ds(row_start, tile), :]            # [tile, d_pad]
            xc = e_ref[pl.ds(col_start, tile), :]            # [tile, d_pad]
            rc = r_ref[j_blk]                                # [1, tile]
            rr = jnp.transpose(r_ref[i_blk])                 # [tile, 1]
            if bf16_matmul:
                g = lax.dot_general(xr.astype(jnp.bfloat16),
                                    xc.astype(jnp.bfloat16),
                                    (((1,), (1,)), ((), ())),
                                    preferred_element_type=jnp.float32)
            else:
                g = lax.dot_general(xr, xc, (((1,), (1,)), ((), ())),
                                    preferred_element_type=jnp.float32)
            # Gram identity; clamp cancellation noise at 0.
            d2 = jnp.maximum(rr + rc - 2.0 * g, 0.0)
            if bf16_matmul:
                d2 = jnp.where(diag_mask, 0.0, d2)           # exact diagonal
            k = jnp.exp(-0.5 * d2)
            if need_mask:
                k = jnp.where(pad_mask, k, 0.0)              # drop padded rows/cols
            return k

        k1 = rbf_tile(e1_ref, r1_ref)
        k2 = rbf_tile(e2_ref, r2_ref)

        # Lane-dense per-pair partials; symmetry weighting and the scatter-add
        # into row blocks happen in the wrapper.
        row1_ref[0] = jnp.transpose(jnp.sum(k1, axis=1, keepdims=True))
        col1_ref[0] = jnp.sum(k1, axis=0, keepdims=True)
        row2_ref[0] = jnp.transpose(jnp.sum(k2, axis=1, keepdims=True))
        col2_ref[0] = jnp.sum(k2, axis=0, keepdims=True)
        frob_ref[0] = jnp.sum(k1 * k2, axis=0, keepdims=True)

    return kernel


def hsic_loss(embeddings1, embeddings2, *, block=None, bf16_matmul=False):
    """JAX/Pallas equivalent of HSICLoss().forward(embeddings1, embeddings2)."""
    assert embeddings1.shape == embeddings2.shape and embeddings1.ndim == 2
    n, d = embeddings1.shape
    tile = _choose_tile(n, block)
    n_pad = _round_up(n, tile)
    d_pad = max(128, _round_up(d, 128))
    nm = n_pad // tile

    def pad(e):
        e = e.astype(jnp.float32)
        return jnp.zeros((n_pad, d_pad), jnp.float32).at[:n, :d].set(e)

    e1p = pad(embeddings1)
    e2p = pad(embeddings2)
    # Squared row norms, per row block, lane-major.
    r1n = jnp.sum(e1p * e1p, axis=1).reshape(nm, 1, tile)
    r2n = jnp.sum(e2p * e2p, axis=1).reshape(nm, 1, tile)

    # Upper-triangular block pairs (K[j,i] tile == K[i,j] tile transposed).
    ii_np, jj_np = np.triu_indices(nm)
    ii_np = ii_np.astype(np.int32)
    jj_np = jj_np.astype(np.int32)
    npairs = int(ii_np.shape[0])

    kernel = _make_hsic_pair_kernel(n, n_pad, tile, bf16_matmul)

    pair_out = jax.ShapeDtypeStruct((npairs, 1, tile), jnp.float32)
    pair_spec = pl.BlockSpec((1, 1, tile), lambda p, ii, jj: (p, 0, 0))

    def full(shape):
        return pl.BlockSpec(shape, lambda p, ii, jj: (0,) * len(shape))

    # Rough VMEM budget (resident inputs + per-step working set); only raise
    # the scoped limit when the per-chip defaults would not fit.
    est = (2 * n_pad * d_pad + 2 * nm * 8 * tile + 10 * tile * tile) * 4
    cp_kwargs = dict(dimension_semantics=("parallel",))
    if est > 24 * 1024 * 1024:
        # TODO(synk): for very large N*D switch to streamed (non-resident)
        # row/col blocks instead of raising the limit (v7x has 64 MiB VMEM).
        cp_kwargs["vmem_limit_bytes"] = int(min(2 * est, 96 * 1024 * 1024))

    outs = pl.pallas_call(
        kernel,
        out_shape=(pair_out,) * 5,
        grid_spec=pltpu.PrefetchScalarGridSpec(
            num_scalar_prefetch=2,
            grid=(npairs,),
            in_specs=[
                full((n_pad, d_pad)),   # e1, resident in VMEM
                full((n_pad, d_pad)),   # e2, resident in VMEM
                full((nm, 1, tile)),    # ||e1||^2 per row block
                full((nm, 1, tile)),    # ||e2||^2 per row block
            ],
            out_specs=[pair_spec] * 5,
        ),
        compiler_params=pltpu.CompilerParams(**cp_kwargs),
    )(jnp.asarray(ii_np), jnp.asarray(jj_np), e1p, e2p, r1n, r2n)

    row1, col1, row2, col2, frobp = [o[:, 0, :] for o in outs]   # (npairs, tile)

    # Wrapper-side combine (O(N), plain JAX): symmetry weights + scatter-add of
    # per-pair partial sums into per-row-block row sums, then the closed form.
    off = ii_np != jj_np
    frob_w = jnp.asarray(np.where(off, 2.0, 1.0).astype(np.float32))
    blocks = np.arange(nm)
    sel_i = jnp.asarray((ii_np[None, :] == blocks[:, None]).astype(np.float32))
    sel_j = jnp.asarray(((jj_np[None, :] == blocks[:, None]) & off[None, :])
                        .astype(np.float32))

    frob = jnp.sum(frobp * frob_w[:, None])          # sum(K1 ∘ K2)
    rs1 = sel_i @ row1 + sel_j @ col1                # (nm, tile) row sums of K1
    rs2 = sel_i @ row2 + sel_j @ col2
    r1v = rs1.reshape(-1)                            # padded rows are exact 0
    r2v = rs2.reshape(-1)
    s1 = jnp.sum(r1v)
    s2 = jnp.sum(r2v)
    cross = jnp.sum(r1v * r2v)
    n_f = float(n)
    hsic = (frob - (2.0 / n_f) * cross + (s1 * s2) / (n_f * n_f)) / (n_f * n_f)
    return hsic


def _hsic_loss_ref(e1, e2):
    """Pure-JAX reference, faithful to the PyTorch module (cdist formulation)."""
    def rbf(x):
        diff = x[:, None, :] - x[None, :, :]
        d2 = jnp.sum(diff * diff, axis=-1)
        return jnp.exp(-d2 / 2.0)

    def center(k):
        return k - k.mean(axis=0, keepdims=True) - k.mean(axis=1, keepdims=True) + k.mean()

    k1c = center(rbf(e1.astype(jnp.float32)))
    k2c = center(rbf(e2.astype(jnp.float32)))
    return jnp.sum(k1c * k2c) / (e1.shape[0] ** 2)   # forward = 1 - (1 - hsic)


if __name__ == "__main__":
    key = jax.random.PRNGKey(0)
    ka, kb, kc, kd, ke, kf = jax.random.split(key, 6)

    # 1) Small single-block case: N=8, D=32 -> one pair, one (8, 8) tile.
    e1 = 0.3 * jax.random.normal(ka, (8, 32), dtype=jnp.float32)
    e2 = 0.3 * jax.random.normal(kb, (8, 32), dtype=jnp.float32)
    out1 = hsic_loss(e1, e2)
    jax.block_until_ready(out1)
    ref1 = _hsic_loss_ref(e1, e2)
    assert jnp.allclose(out1, ref1, atol=1e-5, rtol=1e-4), (out1, ref1)

    # 2) Multi-block symmetric-pair path: N=32, tile=16 -> 2x2 blocks, 3 pairs.
    f1 = 0.3 * jax.random.normal(kc, (32, 32), dtype=jnp.float32)
    f2 = 0.3 * jax.random.normal(kd, (32, 32), dtype=jnp.float32)
    out2 = hsic_loss(f1, f2, block=16)
    jax.block_until_ready(out2)
    ref2 = _hsic_loss_ref(f1, f2)
    assert jnp.allclose(out2, ref2, atol=1e-5, rtol=1e-4), (out2, ref2)

    # 3) Padded / masked path: N=20 (pads to 24, tile=8), D=20 (pads to 128).
    g1 = 0.3 * jax.random.normal(ke, (20, 20), dtype=jnp.float32)
    g2 = 0.3 * jax.random.normal(kf, (20, 20), dtype=jnp.float32)
    out3 = hsic_loss(g1, g2, block=8)
    jax.block_until_ready(out3)
    ref3 = _hsic_loss_ref(g1, g2)
    assert jnp.allclose(out3, ref3, atol=1e-5, rtol=1e-4), (out3, ref3)

    # 4) bf16 MXU path (diagonal-masked): loose-tolerance smoke check.
    out4 = hsic_loss(f1, f2, block=16, bf16_matmul=True)
    jax.block_until_ready(out4)
    assert jnp.abs(out4 - ref2) < 1e-2, (out4, ref2)

    print("KERNEL_OK")
</pallas_src>

<mosaic_0001>
module attributes {stable_mosaic.version = 11 : i64} {
  func.func @kernel(%arg0: i32, %arg1: memref<1xi32, #tpu.memory_space<smem>>, %arg2: memref<1xi32, #tpu.memory_space<smem>>, %arg3: memref<8x128xf32, #tpu.memory_space<vmem>>, %arg4: memref<8x128xf32, #tpu.memory_space<vmem>>, %arg5: memref<1x1x8xf32, #tpu.memory_space<vmem>>, %arg6: memref<1x1x8xf32, #tpu.memory_space<vmem>>, %arg7: memref<1x1x8xf32, #tpu.memory_space<vmem>>, %arg8: memref<1x1x8xf32, #tpu.memory_space<vmem>>, %arg9: memref<1x1x8xf32, #tpu.memory_space<vmem>>, %arg10: memref<1x1x8xf32, #tpu.memory_space<vmem>>, %arg11: memref<1x1x8xf32, #tpu.memory_space<vmem>>) attributes {dimension_semantics = [#tpu.dimension_semantics<parallel>], iteration_bounds = array<i64: 1>, scalar_prefetch = 2 : i64, scratch_operands = 0 : i64, tpu.core_type = #tpu.core_type<tc>, window_params = [{pipeline_mode = #tpu.pipeline_mode<synchronous>, transform_indices = @transform_0, window_bounds = array<i64: 8, 128>}, {pipeline_mode = #tpu.pipeline_mode<synchronous>, transform_indices = @transform_1, window_bounds = array<i64: 8, 128>}, {pipeline_mode = #tpu.pipeline_mode<synchronous>, transform_indices = @transform_2, window_bounds = array<i64: 1, 1, 8>}, {pipeline_mode = #tpu.pipeline_mode<synchronous>, transform_indices = @transform_3, window_bounds = array<i64: 1, 1, 8>}, {transform_indices = @transform_4, window_bounds = array<i64: 1, 1, 8>}, {transform_indices = @transform_5, window_bounds = array<i64: 1, 1, 8>}, {transform_indices = @transform_6, window_bounds = array<i64: 1, 1, 8>}, {transform_indices = @transform_7, window_bounds = array<i64: 1, 1, 8>}, {transform_indices = @transform_8, window_bounds = array<i64: 1, 1, 8>}]} {
    %0 = arith.index_cast %arg0 : i32 to index
    %1 = memref.load %arg1[%0] : memref<1xi32, #tpu.memory_space<smem>>
    %2 = arith.index_cast %arg0 : i32 to index
    %3 = memref.load %arg2[%2] : memref<1xi32, #tpu.memory_space<smem>>
    %c8_i32 = arith.constant 8 : i32
    %4 = arith.muli %1, %c8_i32 : i32
    %5 = tpu.assume_multiple %4, 8 : i32
    %c8_i32_0 = arith.constant 8 : i32
    %6 = arith.muli %3, %c8_i32_0 : i32
    %7 = tpu.assume_multiple %6, 8 : i32
    %8 = arith.index_cast %5 : i32 to index
    %c0 = arith.constant 0 : index
    %9 = vector.load %arg3[%8, %c0] : memref<8x128xf32, #tpu.memory_space<vmem>>, vector<8x128xf32>
    %10 = arith.index_cast %7 : i32 to index
    %c0_1 = arith.constant 0 : index
    %11 = vector.load %arg3[%10, %c0_1] : memref<8x128xf32, #tpu.memory_space<vmem>>, vector<8x128xf32>
    %12 = arith.index_cast %3 : i32 to index
    %c0_2 = arith.constant 0 : index
    %c0_3 = arith.constant 0 : index
    %13 = vector.load %arg5[%12, %c0_2, %c0_3] : memref<1x1x8xf32, #tpu.memory_space<vmem>>, vector<1x1x8xf32>
    %14 = vector.shape_cast %13 : vector<1x1x8xf32> to vector<1x8xf32>
    %15 = arith.index_cast %1 : i32 to index
    %c0_4 = arith.constant 0 : index
    %c0_5 = arith.constant 0 : index
    %16 = vector.load %arg5[%15, %c0_4, %c0_5] : memref<1x1x8xf32, #tpu.memory_space<vmem>>, vector<1x1x8xf32>
    %17 = vector.shape_cast %16 : vector<1x1x8xf32> to vector<1x8xf32>
    %18 = tpu.transpose %17, [1, 0] : vector<1x8xf32> -> vector<8x1xf32>
    %cst = arith.constant dense<0.000000e+00> : vector<8x8xf32>
    %19 = tpu.matmul %9, %11, %cst {dimension_numbers = #tpu.dot_dimension_numbers<[1], [1], [0], [0], [0, 0, 1, 0], [], []>} : vector<8x128xf32>, vector<8x128xf32>, vector<8x8xf32> -> vector<8x8xf32>
    %20 = vector.broadcast %18 : vector<8x1xf32> to vector<8x8xf32>
    %21 = vector.broadcast %14 : vector<1x8xf32> to vector<8x8xf32>
    %22 = arith.addf %20, %21 : vector<8x8xf32>
    %cst_6 = arith.constant 2.000000e+00 : f32
    %23 = vector.broadcast %cst_6 : f32 to vector<8x8xf32>
    %24 = arith.mulf %23, %19 : vector<8x8xf32>
    %25 = arith.subf %22, %24 : vector<8x8xf32>
    %cst_7 = arith.constant 0.000000e+00 : f32
    %26 = vector.broadcast %cst_7 : f32 to vector<8x8xf32>
    %27 = arith.maximumf %25, %26 : vector<8x8xf32>
    %cst_8 = arith.constant -5.000000e-01 : f32
    %28 = vector.broadcast %cst_8 : f32 to vector<8x8xf32>
    %29 = arith.mulf %28, %27 : vector<8x8xf32>
    %30 = math.exp %29 : vector<8x8xf32>
    %31 = arith.index_cast %5 : i32 to index
    %c0_9 = arith.constant 0 : index
    %32 = vector.load %arg4[%31, %c0_9] : memref<8x128xf32, #tpu.memory_space<vmem>>, vector<8x128xf32>
    %33 = arith.index_cast %7 : i32 to index
    %c0_10 = arith.constant 0 : index
    %34 = vector.load %arg4[%33, %c0_10] : memref<8x128xf32, #tpu.memory_space<vmem>>, vector<8x128xf32>
    %35 = arith.index_cast %3 : i32 to index
    %c0_11 = arith.constant 0 : index
    %c0_12 = arith.constant 0 : index
    %36 = vector.load %arg6[%35, %c0_11, %c0_12] : memref<1x1x8xf32, #tpu.memory_space<vmem>>, vector<1x1x8xf32>
    %37 = vector.shape_cast %36 : vector<1x1x8xf32> to vector<1x8xf32>
    %38 = arith.index_cast %1 : i32 to index
    %c0_13 = arith.constant 0 : index
    %c0_14 = arith.constant 0 : index
    %39 = vector.load %arg6[%38, %c0_13, %c0_14] : memref<1x1x8xf32, #tpu.memory_space<vmem>>, vector<1x1x8xf32>
    %40 = vector.shape_cast %39 : vector<1x1x8xf32> to vector<1x8xf32>
    %41 = tpu.transpose %40, [1, 0] : vector<1x8xf32> -> vector<8x1xf32>
    %cst_15 = arith.constant dense<0.000000e+00> : vector<8x8xf32>
    %42 = tpu.matmul %32, %34, %cst_15 {dimension_numbers = #tpu.dot_dimension_numbers<[1], [1], [0], [0], [0, 0, 1, 0], [], []>} : vector<8x128xf32>, vector<8x128xf32>, vector<8x8xf32> -> vector<8x8xf32>
    %43 = vector.broadcast %41 : vector<8x1xf32> to vector<8x8xf32>
    %44 = vector.broadcast %37 : vector<1x8xf32> to vector<8x8xf32>
    %45 = arith.addf %43, %44 : vector<8x8xf32>
    %cst_16 = arith.constant 2.000000e+00 : f32
    %46 = vector.broadcast %cst_16 : f32 to vector<8x8xf32>
    %47 = arith.mulf %46, %42 : vector<8x8xf32>
    %48 = arith.subf %45, %47 : vector<8x8xf32>
    %cst_17 = arith.constant 0.000000e+00 : f32
    %49 = vector.broadcast %cst_17 : f32 to vector<8x8xf32>
    %50 = arith.maximumf %48, %49 : vector<8x8xf32>
    %cst_18 = arith.constant -5.000000e-01 : f32
    %51 = vector.broadcast %cst_18 : f32 to vector<8x8xf32>
    %52 = arith.mulf %51, %50 : vector<8x8xf32>
    %53 = math.exp %52 : vector<8x8xf32>
    %cst_19 = arith.constant dense<0.000000e+00> : vector<8xf32>
    %54 = vector.multi_reduction <add>, %30, %cst_19 [1] : vector<8x8xf32> to vector<8xf32>
    %55 = vector.shape_cast %54 : vector<8xf32> to vector<8x1xf32>
    %56 = tpu.transpose %55, [1, 0] : vector<8x1xf32> -> vector<1x8xf32>
    %c0_20 = arith.constant 0 : index
    %c0_21 = arith.constant 0 : index
    %c0_22 = arith.constant 0 : index
    %57 = vector.load %arg7[%c0_20, %c0_21, %c0_22] : memref<1x1x8xf32, #tpu.memory_space<vmem>>, vector<1x1x8xf32>
    %58 = vector.shape_cast %57 : vector<1x1x8xf32> to vector<1x8xf32>
    %59 = vector.shape_cast %56 : vector<1x8xf32> to vector<1x1x8xf32>
    tpu.vector_store %arg7[%c0_20, %c0_21, %c0_22], %59 {strides = array<i32>} : memref<1x1x8xf32, #tpu.memory_space<vmem>>, vector<1x1x8xf32>,
    %cst_23 = arith.constant dense<0.000000e+00> : vector<8xf32>
    %60 = vector.multi_reduction <add>, %30, %cst_23 [0] : vector<8x8xf32> to vector<8xf32>
    %61 = vector.shape_cast %60 : vector<8xf32> to vector<1x8xf32>
    %c0_24 = arith.constant 0 : index
    %c0_25 = arith.constant 0 : index
    %c0_26 = arith.constant 0 : index
    %62 = vector.load %arg8[%c0_24, %c0_25, %c0_26] : memref<1x1x8xf32, #tpu.memory_space<vmem>>, vector<1x1x8xf32>
    %63 = vector.shape_cast %62 : vector<1x1x8xf32> to vector<1x8xf32>
    %64 = vector.shape_cast %61 : vector<1x8xf32> to vector<1x1x8xf32>
    tpu.vector_store %arg8[%c0_24, %c0_25, %c0_26], %64 {strides = array<i32>} : memref<1x1x8xf32, #tpu.memory_space<vmem>>, vector<1x1x8xf32>,
    %cst_27 = arith.constant dense<0.000000e+00> : vector<8xf32>
    %65 = vector.multi_reduction <add>, %53, %cst_27 [1] : vector<8x8xf32> to vector<8xf32>
    %66 = vector.shape_cast %65 : vector<8xf32> to vector<8x1xf32>
    %67 = tpu.transpose %66, [1, 0] : vector<8x1xf32> -> vector<1x8xf32>
    %c0_28 = arith.constant 0 : index
    %c0_29 = arith.constant 0 : index
    %c0_30 = arith.constant 0 : index
    %68 = vector.load %arg9[%c0_28, %c0_29, %c0_30] : memref<1x1x8xf32, #tpu.memory_space<vmem>>, vector<1x1x8xf32>
    %69 = vector.shape_cast %68 : vector<1x1x8xf32> to vector<1x8xf32>
    %70 = vector.shape_cast %67 : vector<1x8xf32> to vector<1x1x8xf32>
    tpu.vector_store %arg9[%c0_28, %c0_29, %c0_30], %70 {strides = array<i32>} : memref<1x1x8xf32, #tpu.memory_space<vmem>>, vector<1x1x8xf32>,
    %cst_31 = arith.constant dense<0.000000e+00> : vector<8xf32>
    %71 = vector.multi_reduction <add>, %53, %cst_31 [0] : vector<8x8xf32> to vector<8xf32>
    %72 = vector.shape_cast %71 : vector<8xf32> to vector<1x8xf32>
    %c0_32 = arith.constant 0 : index
    %c0_33 = arith.constant 0 : index
    %c0_34 = arith.constant 0 : index
    %73 = vector.load %arg10[%c0_32, %c0_33, %c0_34] : memref<1x1x8xf32, #tpu.memory_space<vmem>>, vector<1x1x8xf32>
    %74 = vector.shape_cast %73 : vector<1x1x8xf32> to vector<1x8xf32>
    %75 = vector.shape_cast %72 : vector<1x8xf32> to vector<1x1x8xf32>
    tpu.vector_store %arg10[%c0_32, %c0_33, %c0_34], %75 {strides = array<i32>} : memref<1x1x8xf32, #tpu.memory_space<vmem>>, vector<1x1x8xf32>,
    %76 = arith.mulf %30, %53 : vector<8x8xf32>
    %cst_35 = arith.constant dense<0.000000e+00> : vector<8xf32>
    %77 = vector.multi_reduction <add>, %76, %cst_35 [0] : vector<8x8xf32> to vector<8xf32>
    %78 = vector.shape_cast %77 : vector<8xf32> to vector<1x8xf32>
    %c0_36 = arith.constant 0 : index
    %c0_37 = arith.constant 0 : index
    %c0_38 = arith.constant 0 : index
    %79 = vector.load %arg11[%c0_36, %c0_37, %c0_38] : memref<1x1x8xf32, #tpu.memory_space<vmem>>, vector<1x1x8xf32>
    %80 = vector.shape_cast %79 : vector<1x1x8xf32> to vector<1x8xf32>
    %81 = vector.shape_cast %78 : vector<1x8xf32> to vector<1x1x8xf32>
    tpu.vector_store %arg11[%c0_36, %c0_37, %c0_38], %81 {strides = array<i32>} : memref<1x1x8xf32, #tpu.memory_space<vmem>>, vector<1x1x8xf32>,
    return
  }
  func.func @transform_0(%arg0: i32, %arg1: memref<1xi32, #tpu.memory_space<smem>>, %arg2: memref<1xi32, #tpu.memory_space<smem>>) -> (i32, i32) {
    %c0_i32 = arith.constant 0 : i32
    %c0_i32_0 = arith.constant 0 : i32
    %c0_i32_1 = arith.constant 0 : i32
    return %c0_i32, %c0_i32_0 : i32, i32
  }
  func.func @transform_1(%arg0: i32, %arg1: memref<1xi32, #tpu.memory_space<smem>>, %arg2: memref<1xi32, #tpu.memory_space<smem>>) -> (i32, i32) {
    %c0_i32 = arith.constant 0 : i32
    %c0_i32_0 = arith.constant 0 : i32
    %c0_i32_1 = arith.constant 0 : i32
    return %c0_i32, %c0_i32_0 : i32, i32
  }
  func.func @transform_2(%arg0: i32, %arg1: memref<1xi32, #tpu.memory_space<smem>>, %arg2: memref<1xi32, #tpu.memory_space<smem>>) -> (i32, i32, i32) {
    %c0_i32 = arith.constant 0 : i32
    %c0_i32_0 = arith.constant 0 : i32
    %c0_i32_1 = arith.constant 0 : i32
    %c0_i32_2 = arith.constant 0 : i32
    return %c0_i32, %c0_i32_0, %c0_i32_1 : i32, i32, i32
  }
  func.func @transform_3(%arg0: i32, %arg1: memref<1xi32, #tpu.memory_space<smem>>, %arg2: memref<1xi32, #tpu.memory_space<smem>>) -> (i32, i32, i32) {
    %c0_i32 = arith.constant 0 : i32
    %c0_i32_0 = arith.constant 0 : i32
    %c0_i32_1 = arith.constant 0 : i32
    %c0_i32_2 = arith.constant 0 : i32
    return %c0_i32, %c0_i32_0, %c0_i32_1 : i32, i32, i32
  }
  func.func @transform_4(%arg0: i32, %arg1: memref<1xi32, #tpu.memory_space<smem>>, %arg2: memref<1xi32, #tpu.memory_space<smem>>) -> (i32, i32, i32) {
    %c0_i32 = arith.constant 0 : i32
    %c0_i32_0 = arith.constant 0 : i32
    %c0_i32_1 = arith.constant 0 : i32
    return %arg0, %c0_i32, %c0_i32_0 : i32, i32, i32
  }
  func.func @transform_5(%arg0: i32, %arg1: memref<1xi32, #tpu.memory_space<smem>>, %arg2: memref<1xi32, #tpu.memory_space<smem>>) -> (i32, i32, i32) {
    %c0_i32 = arith.constant 0 : i32
    %c0_i32_0 = arith.constant 0 : i32
    %c0_i32_1 = arith.constant 0 : i32
    return %arg0, %c0_i32, %c0_i32_0 : i32, i32, i32
  }
  func.func @transform_6(%arg0: i32, %arg1: memref<1xi32, #tpu.memory_space<smem>>, %arg2: memref<1xi32, #tpu.memory_space<smem>>) -> (i32, i32, i32) {
    %c0_i32 = arith.constant 0 : i32
    %c0_i32_0 = arith.constant 0 : i32
    %c0_i32_1 = arith.constant 0 : i32
    return %arg0, %c0_i32, %c0_i32_0 : i32, i32, i32
  }
  func.func @transform_7(%arg0: i32, %arg1: memref<1xi32, #tpu.memory_space<smem>>, %arg2: memref<1xi32, #tpu.memory_space<smem>>) -> (i32, i32, i32) {
    %c0_i32 = arith.constant 0 : i32
    %c0_i32_0 = arith.constant 0 : i32
    %c0_i32_1 = arith.constant 0 : i32
    return %arg0, %c0_i32, %c0_i32_0 : i32, i32, i32
  }
  func.func @transform_8(%arg0: i32, %arg1: memref<1xi32, #tpu.memory_space<smem>>, %arg2: memref<1xi32, #tpu.memory_space<smem>>) -> (i32, i32, i32) {
    %c0_i32 = arith.constant 0 : i32
    %c0_i32_0 = arith.constant 0 : i32
    %c0_i32_1 = arith.constant 0 : i32
    return %arg0, %c0_i32, %c0_i32_0 : i32, i32, i32
  }
}

</mosaic_0001>

<llo_original>
// kernel: tpu_custom_call.1
$region0: #{tpu_custom_call.1}
  #allocation0 [shape = 'u32[]', space=smem, size = 0x4, offset = 0x4, fixed_abs, tag = 'smem constant byte address 0x4 - core index']
  #allocation1 [shape = 'u32[144,128]{1,0:T(1,128)}', space=vmem, size = 0x12000, scoped, tag = 'internal scratch']
  #allocation2 [shape = 's32[1]{0}', space=sflag, size = 0x4, scoped, tag = 'scoped memory for tpu_custom_call.1']
  #allocation3 [shape = 's32[1]{0:T(128)S(6)}', space=smem, size = 0x200, scoped, tag = 'prefetched SMEM operand 0']
  #allocation4 [shape = 's32[1]{0:T(128)S(6)}', space=smem, size = 0x200, scoped, tag = 'prefetched SMEM operand 1']
  %s0 = inlined_call_operand.<no memory space> [shape: s32[1], index: 0, kind: input, shape index: {}]
  %s1 = inlined_call_operand.<no memory space> [shape: s32[1], index: 1, kind: input, shape index: {}]
  %s2 = inlined_call_operand.hbm [shape: f32[8,128], index: 2, kind: input, shape index: {}]
  %s3 = inlined_call_operand.vmem [shape: f32[8,128], index: 3, kind: input, shape index: {}]
  %s4 = inlined_call_operand.vmem [shape: f32[1,1,8], index: 4, kind: input, shape index: {}]
  %s5 = inlined_call_operand.vmem [shape: f32[1,1,8], index: 5, kind: input, shape index: {}]
  %s6 = inlined_call_operand.hbm [shape: f32[1,1,8], index: 6, kind: output, shape index: {0}]
  %s7 = inlined_call_operand.hbm [shape: f32[1,1,8], index: 7, kind: output, shape index: {1}]
  %s8 = inlined_call_operand.hbm [shape: f32[1,1,8], index: 8, kind: output, shape index: {2}]
  %s9 = inlined_call_operand.hbm [shape: f32[1,1,8], index: 9, kind: output, shape index: {3}]
  %s10 = inlined_call_operand.hbm [shape: f32[1,1,8], index: 10, kind: output, shape index: {4}]
  %11 = xla_tuple %s6, %s7, %s8, %s9, %s10
  %s12 = sld [smem:[#allocation0]]
  $region62: #{tpu_custom_call.1} parent=0
    _
  %s14 = ssub.s32 1, %s12
  %s15 = scalar_select 0, %s14, %s12
  %16 = sst [smem:[#allocation3]] %s0
  %17 = sst [smem:[#allocation4]] %s1
  $region1: #{tpu_custom_call.1} parent=0
    #allocation5 [shape = 'u8[4096]{0}', space=vmem, size = 0x1000, scoped, tag = 'input window, operand 2, single buffered']
    #allocation6 [shape = 's32[1]{0}', space=sflag, size = 0x4, scoped, tag = 'scoped memory for tpu_custom_call.1']
    #allocation7 [shape = 's32[1]{0}', space=sflag, size = 0x4, scoped, tag = 'scoped memory for tpu_custom_call.1']
    #allocation8 [shape = 'u8[512]{0}', space=vmem, size = 0x400, scoped, tag = 'output window, operand 0, single buffered']
    #allocation9 [shape = 'u8[512]{0}', space=vmem, size = 0x400, scoped, tag = 'output window, operand 1, single buffered']
    #allocation10 [shape = 's32[1]{0}', space=sflag, size = 0x4, scoped, tag = 'scoped memory for tpu_custom_call.1']
    #allocation11 [shape = 'u8[512]{0}', space=vmem, size = 0x400, scoped, tag = 'output window, operand 2, single buffered']
    #allocation12 [shape = 'u8[512]{0}', space=vmem, size = 0x400, scoped, tag = 'output window, operand 3, single buffered']
    #allocation13 [shape = 's32[1]{0}', space=sflag, size = 0x4, scoped, tag = 'scoped memory for tpu_custom_call.1']
    #allocation14 [shape = 'u8[512]{0}', space=vmem, size = 0x400, scoped, tag = 'output window, operand 4, single buffered']
    %18 = vsyncpa [#allocation6], 0
    %19 = vsyncpa [#allocation7], 0
    %20 = vsyncpa [#allocation10], 0
    %21 = vsyncpa [#allocation13], 0
    // Predicated region
    $region2: #{tpu_custom_call.1} parent=1 // pred_check
      _
    $region3: #{tpu_custom_call.1} parent=1 // pred_check_branch
      %23 = sbr.rel (0) target = $region5
    $region4: #{tpu_custom_call.1} parent=1 // pred_region
      %s25 = ssub.s32 128, 128
      %26 = vsyncadd [#allocation6], %s25
      %s28 = sshll.u32 [#allocation5], 4
      %s29 = int_to_ptr.vmem [resolvable:$true] %s28
      %31 = dma.hbm_to_vmem [thread:$0]  %s2, 128, %s29, [#allocation6]
    $region5: #{tpu_custom_call.1} parent=1 // pred_fallthru
      _
    // Predicated region
    $region6: #{tpu_custom_call.1} parent=1 // pred_check
      _
    $region7: #{tpu_custom_call.1} parent=1 // pred_check_branch
      %33 = sbr.rel (0) target = $region9
    $region8: #{tpu_custom_call.1} parent=1 // pred_region
      _
    $region9: #{tpu_custom_call.1} parent=1 // pred_fallthru
      _
    // Predicated region
    $region10: #{tpu_custom_call.1} parent=1 // pred_check
      _
    $region11: #{tpu_custom_call.1} parent=1 // pred_check_branch
      %35 = sbr.rel (0) target = $region13
    $region12: #{tpu_custom_call.1} parent=1 // pred_region
      _
    $region13: #{tpu_custom_call.1} parent=1 // pred_fallthru
      _
    // Predicated region
    $region14: #{tpu_custom_call.1} parent=1 // pred_check
      _
    $region15: #{tpu_custom_call.1} parent=1 // pred_check_branch
      %37 = sbr.rel (0) target = $region17
    $region16: #{tpu_custom_call.1} parent=1 // pred_region
      _
    $region17: #{tpu_custom_call.1} parent=1 // pred_fallthru
      _
    // Predicated region
    $region18: #{tpu_custom_call.1} parent=1 // pred_check
      _
    $region19: #{tpu_custom_call.1} parent=1 // pred_check_branch
      %39 = sbr.rel (0) target = $region21
    $region20: #{tpu_custom_call.1} parent=1 // pred_region
      %40 = dma.done [#allocation6], 128
    $region21: #{tpu_custom_call.1} parent=1 // pred_fallthru
      _
    %s41 = sld [smem:[#allocation3]]
    %s42 = sld [smem:[#allocation4]]
    %s43 = smul.u32 %s41, 8
    %s44 = smul.u32 %s42, 8
    %s45 = scalar_lea.vmem [#allocation5], %s43
    %v46 = vld [vmem:[%s45] sm:$0xff]
    %s47 = scalar_lea.vmem [#allocation5], %s44
    %v48 = vld [vmem:[%s47] sm:$0xff]
    %s49 = scalar_lea.vmem %s4, %s42
    %v50 = vld [vmem:[%s49] sm:$0x1]
    %s51 = scalar_lea.vmem %s4, %s41
    %v52 = vld [vmem:[%s51] sm:$0x1]
    %53 = vxpose.xlu0.b32.start [1/16] %v52, 128
    %54 = vxpose.xlu0.b32.cont [2/16] 0.0, 128
    %55 = vxpose.xlu0.b32.cont [3/16] 0.0, 128
    %56 = vxpose.xlu0.b32.cont [4/16] 0.0, 128
    %57 = vxpose.xlu0.b32.cont [5/16] 0.0, 128
    %58 = vxpose.xlu0.b32.cont [6/16] 0.0, 128
    %59 = vxpose.xlu0.b32.cont [7/16] 0.0, 128
    %60 = vxpose.xlu0.b32.cont [8/16] 0.0, 128
    %61 = vxpose.xlu0.b32.cont [9/16] 0.0, 128
    %62 = vxpose.xlu0.b32.cont [10/16] 0.0, 128
    %63 = vxpose.xlu0.b32.cont [11/16] 0.0, 128
    %64 = vxpose.xlu0.b32.cont [12/16] 0.0, 128
    %65 = vxpose.xlu0.b32.cont [13/16] 0.0, 128
    %66 = vxpose.xlu0.b32.cont [14/16] 0.0, 128
    %67 = vxpose.xlu0.b32.cont [15/16] 0.0, 128
    %68 = vxpose.xlu0.b32.end [16/16] 0.0, 128
    %v69 = vpop.trf.xlu0
    %v70 = vpop.trf.xlu0
    %v71 = vpop.trf.xlu0
    %v72 = vpop.trf.xlu0
    %v73 = vpop.trf.xlu0
    %v74 = vpop.trf.xlu0
    %v75 = vpop.trf.xlu0
    %v76 = vpop.trf.xlu0
    %v77 = vpop.trf.xlu0
    %v78 = vpop.trf.xlu0
    %v79 = vpop.trf.xlu0
    %v80 = vpop.trf.xlu0
    %v81 = vpop.trf.xlu0
    %v82 = vpop.trf.xlu0
    %v83 = vpop.trf.xlu0
    %v84 = vpop.trf.xlu0
    %85 = vmatprep.subr.mxu0 0.0
    %86 = vmatpush1.xpose.msra.mxu0 %v48
    %87 = vmatprep.subr.mxu0 0.0
    %88 = vmatpush1.xpose.msra.mxu0 0.0
    %89 = vmatprep.subr.mxu0 0.0
    %90 = vmatpush1.xpose.msra.mxu0 0.0
    %91 = vmatprep.subr.mxu0 0.0
    %92 = vmatpush1.xpose.msra.mxu0 0.0
    %93 = vmatprep.subr.mxu0 0.0
    %94 = vmatpush1.xpose.msra.mxu0 0.0
    %95 = vmatprep.subr.mxu0 0.0
    %96 = vmatpush1.xpose.msra.mxu0 0.0
    %97 = vmatprep.subr.mxu0 0.0
    %98 = vmatpush1.xpose.msra.mxu0 0.0
    %99 = vmatprep.subr.mxu0 0.0
    %100 = vmatpush1.xpose.msra.mxu0 0.0
    %101 = vmatprep.subr.mxu0 0.0
    %102 = vmatpush1.xpose.msra.mxu0 0.0
    %103 = vmatprep.subr.mxu0 0.0
    %104 = vmatpush1.xpose.msra.mxu0 0.0
    %105 = vmatprep.subr.mxu0 0.0
    %106 = vmatpush1.xpose.msra.mxu0 0.0
    %107 = vmatprep.subr.mxu0 0.0
    %108 = vmatpush1.xpose.msra.mxu0 0.0
    %109 = vmatprep.subr.mxu0 0.0
    %110 = vmatpush1.xpose.msra.mxu0 0.0
    %111 = vmatprep.subr.mxu0 0.0
    %112 = vmatpush1.xpose.msra.mxu0 0.0
    %113 = vmatprep.subr.mxu0 0.0
    %114 = vmatpush1.xpose.msra.mxu0 0.0
    %115 = vmatprep.subr.mxu0 0.0
    %116 = vmatpush1.xpose.msra.mxu0 0.0
    %117 = vmatprep.subr.mxu0 0.0
    %118 = vmatpush1.xpose.msra.mxu0 0.0
    %119 = vmatprep.subr.mxu0 0.0
    %120 = vmatpush1.xpose.msra.mxu0 0.0
    %121 = vmatprep.subr.mxu0 0.0
    %122 = vmatpush1.xpose.msra.mxu0 0.0
    %123 = vmatprep.subr.mxu0 0.0
    %124 = vmatpush1.xpose.msra.mxu0 0.0
    %125 = vmatprep.subr.mxu0 0.0
    %126 = vmatpush1.xpose.msra.mxu0 0.0
    %127 = vmatprep.subr.mxu0 0.0
    %128 = vmatpush1.xpose.msra.mxu0 0.0
    %129 = vmatprep.subr.mxu0 0.0
    %130 = vmatpush1.xpose.msra.mxu0 0.0
    %131 = vmatprep.subr.mxu0 0.0
    %132 = vmatpush1.xpose.msra.mxu0 0.0
    %133 = vmatprep.subr.mxu0 0.0
    %134 = vmatpush1.xpose.msra.mxu0 0.0
    %135 = vmatprep.subr.mxu0 0.0
    %136 = vmatpush1.xpose.msra.mxu0 0.0
    %137 = vmatprep.subr.mxu0 0.0
    %138 = vmatpush1.xpose.msra.mxu0 0.0
    %139 = vmatprep.subr.mxu0 0.0
    %140 = vmatpush1.xpose.msra.mxu0 0.0
    %141 = vmatprep.subr.mxu0 0.0
    %142 = vmatpush1.xpose.msra.mxu0 0.0
    %143 = vmatprep.subr.mxu0 0.0
    %144 = vmatpush1.xpose.msra.mxu0 0.0
    %145 = vmatprep.subr.mxu0 0.0
    %146 = vmatpush1.xpose.msra.mxu0 0.0
    %147 = vmatprep.subr.mxu0 0.0
    %148 = vmatpush1.xpose.msra.mxu0 0.0
    %149 = vmatprep.mubr.f32.mxu0 0.0
    %150 = vmatmul.mubr.f32.gmra.mrb[0].mxu0 %v46
    %v151 = vpop.f32.mrb[0].mxu0
    %v152 = vadd.f32 0.0, %v151
    %v153 = vpop.f32.mrb[0].mxu0
    %154 = vdwg.mxu0
    %156 = vset.pattern.permute.xlu0 0
    %157 = vperm.xlu0 %156, %v69
    %v158 = vpop.permute.xlu0 %157
    %v161 = vlaneseq
    %v162 = vshrl.u32 %v161, 7
    %v163 = vsub.s32 0, %v162
    %v164 = vrot.slane %v50, %v163
    %v166 = vadd.f32 %v158, %v164
    %v167 = vmul.f32 %v152, 2.0
    %v168 = vsub.f32 %v166, %v167
    %v169 = vmax.f32 %v168, 0.0
    %v170 = vmul.f32 %v169, -0.5
    %v171 = vmul.f32 %v170, 1.442695
    %v172 = vpow.pop %v171
    %s173 = scalar_lea.vmem %s3, %s43
    %v174 = vld [vmem:[%s173] sm:$0xff]
    %s175 = scalar_lea.vmem %s3, %s44
    %v176 = vld [vmem:[%s175] sm:$0xff]
    %s177 = scalar_lea.vmem %s5, %s42
    %v178 = vld [vmem:[%s177] sm:$0x1]
    %s179 = scalar_lea.vmem %s5, %s41
    %v180 = vld [vmem:[%s179] sm:$0x1]
    %181 = vxpose.xlu0.b32.start [1/16] %v180, 128
    %182 = vxpose.xlu0.b32.cont [2/16] 0.0, 128
    %183 = vxpose.xlu0.b32.cont [3/16] 0.0, 128
    %184 = vxpose.xlu0.b32.cont [4/16] 0.0, 128
    %185 = vxpose.xlu0.b32.cont [5/16] 0.0, 128
    %186 = vxpose.xlu0.b32.cont [6/16] 0.0, 128
    %187 = vxpose.xlu0.b32.cont [7/16] 0.0, 128
    %188 = vxpose.xlu0.b32.cont [8/16] 0.0, 128
    %189 = vxpose.xlu0.b32.cont [9/16] 0.0, 128
    %190 = vxpose.xlu0.b32.cont [10/16] 0.0, 128
    %191 = vxpose.xlu0.b32.cont [11/16] 0.0, 128
    %192 = vxpose.xlu0.b32.cont [12/16] 0.0, 128
    %193 = vxpose.xlu0.b32.cont [13/16] 0.0, 128
    %194 = vxpose.xlu0.b32.cont [14/16] 0.0, 128
    %195 = vxpose.xlu0.b32.cont [15/16] 0.0, 128
    %196 = vxpose.xlu0.b32.end [16/16] 0.0, 128
    %v197 = vpop.trf.xlu0
    %v198 = vpop.trf.xlu0
    %v199 = vpop.trf.xlu0
    %v200 = vpop.trf.xlu0
    %v201 = vpop.trf.xlu0
    %v202 = vpop.trf.xlu0
    %v203 = vpop.trf.xlu0
    %v204 = vpop.trf.xlu0
    %v205 = vpop.trf.xlu0
    %v206 = vpop.trf.xlu0
    %v207 = vpop.trf.xlu0
    %v208 = vpop.trf.xlu0
    %v209 = vpop.trf.xlu0
    %v210 = vpop.trf.xlu0
    %v211 = vpop.trf.xlu0
    %v212 = vpop.trf.xlu0
    %213 = vmatprep.subr.mxu0 0.0
    %214 = vmatpush1.xpose.msra.mxu0 %v176
    %215 = vmatprep.subr.mxu0 0.0
    %216 = vmatpush1.xpose.msra.mxu0 0.0
    %217 = vmatprep.subr.mxu0 0.0
    %218 = vmatpush1.xpose.msra.mxu0 0.0
    %219 = vmatprep.subr.mxu0 0.0
    %220 = vmatpush1.xpose.msra.mxu0 0.0
    %221 = vmatprep.subr.mxu0 0.0
    %222 = vmatpush1.xpose.msra.mxu0 0.0
    %223 = vmatprep.subr.mxu0 0.0
    %224 = vmatpush1.xpose.msra.mxu0 0.0
    %225 = vmatprep.subr.mxu0 0.0
    %226 = vmatpush1.xpose.msra.mxu0 0.0
    %227 = vmatprep.subr.mxu0 0.0
    %228 = vmatpush1.xpose.msra.mxu0 0.0
    %229 = vmatprep.subr.mxu0 0.0
    %230 = vmatpush1.xpose.msra.mxu0 0.0
    %231 = vmatprep.subr.mxu0 0.0
    %232 = vmatpush1.xpose.msra.mxu0 0.0
    %233 = vmatprep.subr.mxu0 0.0
    %234 = vmatpush1.xpose.msra.mxu0 0.0
    %235 = vmatprep.subr.mxu0 0.0
    %236 = vmatpush1.xpose.msra.mxu0 0.0
    %237 = vmatprep.subr.mxu0 0.0
    %238 = vmatpush1.xpose.msra.mxu0 0.0
    %239 = vmatprep.subr.mxu0 0.0
    %240 = vmatpush1.xpose.msra.mxu0 0.0
    %241 = vmatprep.subr.mxu0 0.0
    %242 = vmatpush1.xpose.msra.mxu0 0.0
    %243 = vmatprep.subr.mxu0 0.0
    %244 = vmatpush1.xpose.msra.mxu0 0.0
    %245 = vmatprep.subr.mxu0 0.0
    %246 = vmatpush1.xpose.msra.mxu0 0.0
    %247 = vmatprep.subr.mxu0 0.0
    %248 = vmatpush1.xpose.msra.mxu0 0.0
    %249 = vmatprep.subr.mxu0 0.0
    %250 = vmatpush1.xpose.msra.mxu0 0.0
    %251 = vmatprep.subr.mxu0 0.0
    %252 = vmatpush1.xpose.msra.mxu0 0.0
    %253 = vmatprep.subr.mxu0 0.0
    %254 = vmatpush1.xpose.msra.mxu0 0.0
    %255 = vmatprep.subr.mxu0 0.0
    %256 = vmatpush1.xpose.msra.mxu0 0.0
    %257 = vmatprep.subr.mxu0 0.0
    %258 = vmatpush1.xpose.msra.mxu0 0.0
    %259 = vmatprep.subr.mxu0 0.0
    %260 = vmatpush1.xpose.msra.mxu0 0.0
    %261 = vmatprep.subr.mxu0 0.0
    %262 = vmatpush1.xpose.msra.mxu0 0.0
    %263 = vmatprep.subr.mxu0 0.0
    %264 = vmatpush1.xpose.msra.mxu0 0.0
    %265 = vmatprep.subr.mxu0 0.0
    %266 = vmatpush1.xpose.msra.mxu0 0.0
    %267 = vmatprep.subr.mxu0 0.0
    %268 = vmatpush1.xpose.msra.mxu0 0.0
    %269 = vmatprep.subr.mxu0 0.0
    %270 = vmatpush1.xpose.msra.mxu0 0.0
    %271 = vmatprep.subr.mxu0 0.0
    %272 = vmatpush1.xpose.msra.mxu0 0.0
    %273 = vmatprep.subr.mxu0 0.0
    %274 = vmatpush1.xpose.msra.mxu0 0.0
    %275 = vmatprep.subr.mxu0 0.0
    %276 = vmatpush1.xpose.msra.mxu0 0.0
    %277 = vmatprep.mubr.f32.mxu0 0.0
    %278 = vmatmul.mubr.f32.gmra.mrb[0].mxu0 %v174
    %v279 = vpop.f32.mrb[0].mxu0
    %v280 = vadd.f32 0.0, %v279
    %v281 = vpop.f32.mrb[0].mxu0
    %282 = vdwg.mxu0
    %284 = vset.pattern.permute.xlu0 0
    %285 = vperm.xlu0 %284, %v197
    %v286 = vpop.permute.xlu0 %285
    %v289 = vlaneseq
    %v290 = vshrl.u32 %v289, 7
    %v291 = vsub.s32 0, %v290
    %v292 = vrot.slane %v178, %v291
    %v294 = vadd.f32 %v286, %v292
    %v295 = vmul.f32 %v280, 2.0
    %v296 = vsub.f32 %v294, %v295
    %v297 = vmax.f32 %v296, 0.0
    %v298 = vmul.f32 %v297, -0.5
    %v299 = vmul.f32 %v298, 1.442695
    %v300 = vpow.pop %v299
    %vm301 = vcmask 64512
    %v302 = vsel %vm301, %v172, 0.0
    %303 = vadd.xlane.f32.xlu0 %v302
    %v304 = vpop.xlane.xlu0 %303
    %305 = vxpose.xlu0.b32.start [1/16] %v304, 128
    %306 = vxpose.xlu0.b32.cont [2/16] 0.0, 128
    %307 = vxpose.xlu0.b32.cont [3/16] 0.0, 128
    %308 = vxpose.xlu0.b32.cont [4/16] 0.0, 128
    %309 = vxpose.xlu0.b32.cont [5/16] 0.0, 128
    %310 = vxpose.xlu0.b32.cont [6/16] 0.0, 128
    %311 = vxpose.xlu0.b32.cont [7/16] 0.0, 128
    %312 = vxpose.xlu0.b32.cont [8/16] 0.0, 128
    %313 = vxpose.xlu0.b32.cont [9/16] 0.0, 128
    %314 = vxpose.xlu0.b32.cont [10/16] 0.0, 128
    %315 = vxpose.xlu0.b32.cont [11/16] 0.0, 128
    %316 = vxpose.xlu0.b32.cont [12/16] 0.0, 128
    %317 = vxpose.xlu0.b32.cont [13/16] 0.0, 128
    %318 = vxpose.xlu0.b32.cont [14/16] 0.0, 128
    %319 = vxpose.xlu0.b32.cont [15/16] 0.0, 128
    %320 = vxpose.xlu0.b32.end [16/16] 0.0, 128
    %v321 = vpop.trf.xlu0
    %v322 = vpop.trf.xlu0
    %v323 = vpop.trf.xlu0
    %v324 = vpop.trf.xlu0
    %v325 = vpop.trf.xlu0
    %v326 = vpop.trf.xlu0
    %v327 = vpop.trf.xlu0
    %v328 = vpop.trf.xlu0
    %v329 = vpop.trf.xlu0
    %v330 = vpop.trf.xlu0
    %v331 = vpop.trf.xlu0
    %v332 = vpop.trf.xlu0
    %v333 = vpop.trf.xlu0
    %v334 = vpop.trf.xlu0
    %v335 = vpop.trf.xlu0
    %v336 = vpop.trf.xlu0
    %vm337 = vcmask 57344
    %338 = vst.msk [vmem:[#allocation8] sm:$0x1] %vm337, %v321
    %v339 = vrot.slane %v302, 4
    %v340 = vadd.f32 %v302, %v339
    %v341 = vrot.slane %v340, 2
    %v342 = vadd.f32 %v340, %v341
    %v343 = vrot.slane %v342, 1
    %v344 = vadd.f32 %v342, %v343
    %345 = vst.msk [vmem:[#allocation9] sm:$0x1] %vm337, %v344
    %v346 = vsel %vm301, %v300, 0.0
    %347 = vadd.xlane.f32.xlu0 %v346
    %v348 = vpop.xlane.xlu0 %347
    %349 = vxpose.xlu0.b32.start [1/16] %v348, 128
    %350 = vxpose.xlu0.b32.cont [2/16] 0.0, 128
    %351 = vxpose.xlu0.b32.cont [3/16] 0.0, 128
    %352 = vxpose.xlu0.b32.cont [4/16] 0.0, 128
    %353 = vxpose.xlu0.b32.cont [5/16] 0.0, 128
    %354 = vxpose.xlu0.b32.cont [6/16] 0.0, 128
    %355 = vxpose.xlu0.b32.cont [7/16] 0.0, 128
    %356 = vxpose.xlu0.b32.cont [8/16] 0.0, 128
    %357 = vxpose.xlu0.b32.cont [9/16] 0.0, 128
    %358 = vxpose.xlu0.b32.cont [10/16] 0.0, 128
    %359 = vxpose.xlu0.b32.cont [11/16] 0.0, 128
    %360 = vxpose.xlu0.b32.cont [12/16] 0.0, 128
    %361 = vxpose.xlu0.b32.cont [13/16] 0.0, 128
    %362 = vxpose.xlu0.b32.cont [14/16] 0.0, 128
    %363 = vxpose.xlu0.b32.cont [15/16] 0.0, 128
    %364 = vxpose.xlu0.b32.end [16/16] 0.0, 128
    %v365 = vpop.trf.xlu0
    %v366 = vpop.trf.xlu0
    %v367 = vpop.trf.xlu0
    %v368 = vpop.trf.xlu0
    %v369 = vpop.trf.xlu0
    %v370 = vpop.trf.xlu0
    %v371 = vpop.trf.xlu0
    %v372 = vpop.trf.xlu0
    %v373 = vpop.trf.xlu0
    %v374 = vpop.trf.xlu0
    %v375 = vpop.trf.xlu0
    %v376 = vpop.trf.xlu0
    %v377 = vpop.trf.xlu0
    %v378 = vpop.trf.xlu0
    %v379 = vpop.trf.xlu0
    %v380 = vpop.trf.xlu0
    %381 = vst.msk [vmem:[#allocation11] sm:$0x1] %vm337, %v365
    %v382 = vrot.slane %v346, 4
    %v383 = vadd.f32 %v346, %v382
    %v384 = vrot.slane %v383, 2
    %v385 = vadd.f32 %v383, %v384
    %v386 = vrot.slane %v385, 1
    %v387 = vadd.f32 %v385, %v386
    %388 = vst.msk [vmem:[#allocation12] sm:$0x1] %vm337, %v387
    %v389 = vmul.f32 %v172, %v300
    %v390 = vsel %vm301, %v389, 0.0
    %v391 = vrot.slane %v390, 4
    %v392 = vadd.f32 %v390, %v391
    %v393 = vrot.slane %v392, 2
    %v394 = vadd.f32 %v392, %v393
    %v395 = vrot.slane %v394, 1
    %v396 = vadd.f32 %v394, %v395
    %397 = vst.msk [vmem:[#allocation14] sm:$0x1] %vm337, %v396
    // Predicated region
    $region22: #{tpu_custom_call.1} parent=1 // pred_check
      _
    $region23: #{tpu_custom_call.1} parent=1 // pred_check_branch
      %399 = sbr.rel (0) target = $region25
    $region24: #{tpu_custom_call.1} parent=1 // pred_region
      %s401 = ssub.s32 16, 16
      %402 = vsyncadd [#allocation7], %s401
      %s404 = sshll.u32 [#allocation8], 4
      %s405 = int_to_ptr.vmem [resolvable:$true] %s404
      %407 = dma.vmem_to_hbm [thread:$0]  %s405, 16, %s6, [#allocation7]
    $region25: #{tpu_custom_call.1} parent=1 // pred_fallthru
      _
    // Predicated region
    $region26: #{tpu_custom_call.1} parent=1 // pred_check
      _
    $region27: #{tpu_custom_call.1} parent=1 // pred_check_branch
      %409 = sbr.rel (0) target = $region29
    $region28: #{tpu_custom_call.1} parent=1 // pred_region
      %s411 = ssub.s32 16, 16
      %412 = vsyncadd [#allocation10], %s411
      %s414 = sshll.u32 [#allocation9], 4
      %s415 = int_to_ptr.vmem [resolvable:$true] %s414
      %417 = dma.vmem_to_hbm [thread:$0]  %s415, 16, %s7, [#allocation10]
    $region29: #{tpu_custom_call.1} parent=1 // pred_fallthru
      _
    // Predicated region
    $region30: #{tpu_custom_call.1} parent=1 // pred_check
      _
    $region31: #{tpu_custom_call.1} parent=1 // pred_check_branch
      %419 = sbr.rel (0) target = $region33
    $region32: #{tpu_custom_call.1} parent=1 // pred_region
      %s421 = ssub.s32 16, 16
      %422 = vsyncadd [#allocation10], %s421
      %s424 = sshll.u32 [#allocation11], 4
      %s425 = int_to_ptr.vmem [resolvable:$true] %s424
      %427 = dma.vmem_to_hbm [thread:$0]  %s425, 16, %s8, [#allocation10]
    $region33: #{tpu_custom_call.1} parent=1 // pred_fallthru
      _
    // Predicated region
    $region34: #{tpu_custom_call.1} parent=1 // pred_check
      _
    $region35: #{tpu_custom_call.1} parent=1 // pred_check_branch
      %429 = sbr.rel (0) target = $region37
    $region36: #{tpu_custom_call.1} parent=1 // pred_region
      %s431 = ssub.s32 16, 16
      %432 = vsyncadd [#allocation13], %s431
      %s434 = sshll.u32 [#allocation12], 4
      %s435 = int_to_ptr.vmem [resolvable:$true] %s434
      %437 = dma.vmem_to_hbm [thread:$0]  %s435, 16, %s9, [#allocation13]
    $region37: #{tpu_custom_call.1} parent=1 // pred_fallthru
      _
    // Predicated region
    $region38: #{tpu_custom_call.1} parent=1 // pred_check
      _
    $region39: #{tpu_custom_call.1} parent=1 // pred_check_branch
      %439 = sbr.rel (0) target = $region41
    $region40: #{tpu_custom_call.1} parent=1 // pred_region
      %s441 = ssub.s32 16, 16
      %442 = vsyncadd [#allocation13], %s441
      %s444 = sshll.u32 [#allocation14], 4
      %s445 = int_to_ptr.vmem [resolvable:$true] %s444
      %447 = dma.vmem_to_hbm [thread:$0]  %s445, 16, %s10, [#allocation13]
    $region41: #{tpu_custom_call.1} parent=1 // pred_fallthru
      _
    // Predicated region
    $region42: #{tpu_custom_call.1} parent=1 // pred_check
      _
    $region43: #{tpu_custom_call.1} parent=1 // pred_check_branch
      %449 = sbr.rel (0) target = $region45
    $region44: #{tpu_custom_call.1} parent=1 // pred_region
      %450 = dma.done [#allocation7], 16
    $region45: #{tpu_custom_call.1} parent=1 // pred_fallthru
      _
    // Predicated region
    $region46: #{tpu_custom_call.1} parent=1 // pred_check
      _
    $region47: #{tpu_custom_call.1} parent=1 // pred_check_branch
      %452 = sbr.rel (0) target = $region49
    $region48: #{tpu_custom_call.1} parent=1 // pred_region
      %453 = dma.done [#allocation10], 16
    $region49: #{tpu_custom_call.1} parent=1 // pred_fallthru
      _
    // Predicated region
    $region50: #{tpu_custom_call.1} parent=1 // pred_check
      _
    $region51: #{tpu_custom_call.1} parent=1 // pred_check_branch
      %455 = sbr.rel (0) target = $region53
    $region52: #{tpu_custom_call.1} parent=1 // pred_region
      %456 = dma.done [#allocation10], 16
    $region53: #{tpu_custom_call.1} parent=1 // pred_fallthru
      _
    // Predicated region
    $region54: #{tpu_custom_call.1} parent=1 // pred_check
      _
    $region55: #{tpu_custom_call.1} parent=1 // pred_check_branch
      %458 = sbr.rel (0) target = $region57
    $region56: #{tpu_custom_call.1} parent=1 // pred_region
      %459 = dma.done [#allocation13], 16
    $region57: #{tpu_custom_call.1} parent=1 // pred_fallthru
      _
    // Predicated region
    $region58: #{tpu_custom_call.1} parent=1 // pred_check
      _
    $region59: #{tpu_custom_call.1} parent=1 // pred_check_branch
      %461 = sbr.rel (0) target = $region61
    $region60: #{tpu_custom_call.1} parent=1 // pred_region
      %462 = dma.done [#allocation13], 16
    $region61: #{tpu_custom_call.1} parent=1 // pred_fallthru
      _
    %463 = vsyncpa [#allocation6], 1
    %464 = vsyncpa [#allocation7], 1
    %465 = vsyncpa [#allocation10], 1
    %466 = vsyncpa [#allocation13], 1

</llo_original>
